<compile_context>
chip_gen: v6e
topology: v6e:2x2x1
jax: 0.10.0
libtpu: 0.0.40
codegen_flags: <defaults>
</compile_context>

<pallas_src>
import jax
import jax.numpy as jnp
from jax.experimental import pallas as pl
from jax.experimental.pallas import tpu as pltpu

_NPAD = 128          # fused weight rows: 2 signal rows + 32 hidden rows, zero padded
_HIDDEN = 32


def _round_up(n: int, m: int) -> int:
    return ((n + m - 1) // m) * m


def _adaptive_neuron_kernel(x_ref, wallt_ref, ball_ref, w2d_ref, scal_ref, o_ref):
    # x_ref:    (TM, D)    streamed batch tile (bf16 or f32)
    # wallt_ref:(NPAD, D)  resident fused weights (row0=color, row1=bright, rows2:34=W1^T)
    # ball_ref: (NPAD, 1)  fused bias column (b1 in rows 2:34)
    # w2d_ref:  (NPAD, 1)  selector layer-2 logit-difference column
    # scal_ref: (2,) SMEM  [b2[0]-b2[1], output bias]
    # o_ref:    (1, TM)    lane-dense output row

    # y^T = W_fused @ x^T  -> (NPAD, TM): batch lives on the lane axis, so the
    # whole elementwise tail and the output store are lane-dense.
    y_t = jax.lax.dot_general(
        wallt_ref[...], x_ref[...],
        dimension_numbers=(((1,), (1,)), ((), ())),
        preferred_element_type=jnp.float32,
    ) + ball_ref[...]
    r_t = jnp.maximum(y_t, 0.0)            # ReLU for the two signals AND the hidden layer

    color_sig = r_t[0:1, :]                 # (1, TM)
    bright_sig = r_t[1:2, :]                # (1, TM)

    # Selector layer 2, reduced to the logit difference (exact for 2-class softmax).
    # w2d is zero outside rows 2:34, so signal/padding rows do not leak in.
    logit_diff = jnp.sum(r_t * w2d_ref[...], axis=0, keepdims=True) + scal_ref[0]
    sel0 = 1.0 / (1.0 + jnp.exp(-logit_diff))   # softmax(logits)[:, 0]

    o_ref[...] = sel0 * color_sig + (1.0 - sel0) * bright_sig + scal_ref[1]


def _build_fused_params(params, npad: int = _NPAD, stream_dtype=jnp.bfloat16):
    """Fold (wc, wb, W1, b1, W2, b2, bias) into lane-dense, transposed fused tensors."""
    wc, wb, w1, b1, w2, b2, bias = params
    D, hidden = w1.shape
    mid = wc.shape[0]
    assert 2 + hidden <= npad

    w_all_t = jnp.zeros((npad, D), jnp.float32)
    w_all_t = w_all_t.at[0, :mid].set(wc)                 # color branch
    w_all_t = w_all_t.at[1, mid:].set(wb)                 # brightness branch
    w_all_t = w_all_t.at[2:2 + hidden, :].set(w1.T)       # selector layer 1

    b_all = jnp.zeros((npad, 1), jnp.float32)
    b_all = b_all.at[2:2 + hidden, 0].set(b1)

    w2d = jnp.zeros((npad, 1), jnp.float32)
    w2d = w2d.at[2:2 + hidden, 0].set(w2[:, 0] - w2[:, 1])

    scal = jnp.stack([b2[0] - b2[1], bias[0]]).astype(jnp.float32)  # [b2_diff, output bias]
    return w_all_t.astype(stream_dtype), b_all, w2d, scal


def _pick_tile(batch: int, block_rows: int) -> int:
    """Batch-tile rows: large (amortize per-step overhead), lane/sublane aligned,
    and >= 2 grid steps on large batches so v7x's two TensorCores both get work."""
    align = 128 if batch >= 128 else 8
    tm = min(block_rows, _round_up(batch, align))
    if batch >= 4096 and pl.cdiv(batch, tm) < 2:
        tm = _round_up(pl.cdiv(batch, 2), align)
    return tm


def adaptive_multi_weight_neuron(x, params, *, block_rows: int = 8192,
                                 stream_dtype=jnp.bfloat16):
    """x: (B, D) float32 with D even. Returns (B,) float32.

    stream_dtype: dtype x (and fused weights) are streamed in; bf16 halves HBM
    bytes on this memory-bound kernel, f32 gives the exact reference path.
    Partial last tiles rely on Pallas padding: padded rows compute garbage that
    is sliced off in the wrapper (rows are independent, so results are correct).
    """
    B, D = x.shape
    assert D % 2 == 0, "input_size must be even (feature split at D//2)"
    w_all_t, b_all, w2d, scal = _build_fused_params(params, stream_dtype=stream_dtype)
    npad = w_all_t.shape[0]
    x_s = x.astype(stream_dtype)

    tm = _pick_tile(B, block_rows)
    num_tiles = pl.cdiv(B, tm)
    grid = (num_tiles,)

    active_cols = 2 + _HIDDEN
    flops = 2 * B * D * active_cols + 10 * B * active_cols
    bytes_accessed = (B * D * x_s.dtype.itemsize                # streamed x
                      + num_tiles * tm * 4                      # output
                      + w_all_t.size * x_s.dtype.itemsize
                      + (b_all.size + w2d.size + scal.size) * 4)

    out = pl.pallas_call(
        _adaptive_neuron_kernel,
        out_shape=jax.ShapeDtypeStruct((num_tiles, 1, tm), jnp.float32),
        grid=grid,
        in_specs=[
            # Streamed batch tile; contiguous full rows -> single contiguous DMA.
            # (If the x DMA is still exposed in xprof, sweep pipeline_mode=pl.Buffered(3).)
            pl.BlockSpec((tm, D), lambda i: (i, 0)),
            pl.BlockSpec((npad, D), lambda i: (0, 0)),           # fused weights (resident)
            pl.BlockSpec((npad, 1), lambda i: (0, 0)),           # fused bias column (resident)
            pl.BlockSpec((npad, 1), lambda i: (0, 0)),           # selector diff column (resident)
            pl.BlockSpec(memory_space=pltpu.MemorySpace.SMEM),   # [b2_diff, bias] scalars
        ],
        # Lane-dense output: one (1, tm) row per grid step, unmasked stores.
        out_specs=pl.BlockSpec((None, 1, tm), lambda i: (i, 0, 0)),
        compiler_params=pltpu.CompilerParams(
            dimension_semantics=("parallel",),
            vmem_limit_bytes=48 * 1024 * 1024),
        cost_estimate=pl.CostEstimate(
            flops=flops, transcendentals=B, bytes_accessed=bytes_accessed),
    )(x_s, w_all_t, b_all, w2d, scal)
    return out.reshape(-1)[:B]


def reference_forward(x, params):
    """Pure-JAX reference mirroring the PyTorch forward (2D input path)."""
    wc, wb, w1, b1, w2, b2, bias = params
    mid = x.shape[1] // 2
    color, bright = x[:, :mid], x[:, mid:]
    color_sig = jax.nn.relu(color @ wc)
    bright_sig = jax.nn.relu(bright @ wb)
    h = jax.nn.relu(x @ w1 + b1)
    sel = jax.nn.softmax(h @ w2 + b2, axis=-1)
    return sel[:, 0] * color_sig + sel[:, 1] * bright_sig + bias[0]


def make_params(key, input_size, hidden=_HIDDEN):
    feature_size = input_size // 2
    k = jax.random.split(key, 5)
    wc = jax.random.normal(k[0], (feature_size,), jnp.float32) * 0.01
    wb = jax.random.normal(k[1], (feature_size,), jnp.float32) * 0.01
    # nn.Linear-equivalent params, stored as (in, out) so forward does x @ W + b
    w1 = jax.random.normal(k[2], (input_size, hidden), jnp.float32) * 0.05
    b1 = jnp.zeros((hidden,), jnp.float32)
    w2 = jax.random.normal(k[3], (hidden, 2), jnp.float32) * 0.05
    b2 = jnp.zeros((2,), jnp.float32)
    bias = jnp.zeros((1,), jnp.float32)
    return (wc, wb, w1, b1, w2, b2, bias)


if __name__ == "__main__":
    input_size = 64
    key = jax.random.PRNGKey(0)
    kx, kp, kx2 = jax.random.split(key, 3)
    params = make_params(kp, input_size)

    # Small single-tile check on the exact (f32-streamed) path.
    x = jax.random.normal(kx, (8, input_size), jnp.float32)
    out = adaptive_multi_weight_neuron(x, params, stream_dtype=jnp.float32)
    jax.block_until_ready(out)
    ref = reference_forward(x, params)
    assert out.shape == (8,)
    assert jnp.allclose(out, ref, atol=1e-5, rtol=1e-5), (out, ref)

    # Multi-tile grid path (>= 2 grid steps), default bf16 streaming.
    x2 = jax.random.normal(kx2, (4096, input_size), jnp.float32)
    out2 = adaptive_multi_weight_neuron(x2, params)
    jax.block_until_ready(out2)
    ref2 = reference_forward(x2, params)
    assert out2.shape == (4096,)
    assert jnp.max(jnp.abs(out2 - ref2)) < 2e-2, float(jnp.max(jnp.abs(out2 - ref2)))

    print("KERNEL_OK")
</pallas_src>

<mosaic_0001>
module attributes {stable_mosaic.version = 11 : i64} {
  func.func @_adaptive_neuron_kernel(%arg0: i32, %arg1: memref<8x64xf32, #tpu.memory_space<vmem>>, %arg2: memref<128x64xf32, #tpu.memory_space<vmem>>, %arg3: memref<128x1xf32, #tpu.memory_space<vmem>>, %arg4: memref<128x1xf32, #tpu.memory_space<vmem>>, %arg5: memref<2xf32, #tpu.memory_space<smem>>, %arg6: memref<1x1x8xf32, #tpu.memory_space<vmem>>) attributes {dimension_semantics = [#tpu.dimension_semantics<parallel>], iteration_bounds = array<i64: 1>, scalar_prefetch = 0 : i64, scratch_operands = 0 : i64, tpu.core_type = #tpu.core_type<tc>, window_params = [{transform_indices = @transform_0, window_bounds = array<i64: 8, 64>}, {pipeline_mode = #tpu.pipeline_mode<synchronous>, transform_indices = @transform_1, window_bounds = array<i64: 128, 64>}, {pipeline_mode = #tpu.pipeline_mode<synchronous>, transform_indices = @transform_2, window_bounds = array<i64: 128, 1>}, {pipeline_mode = #tpu.pipeline_mode<synchronous>, transform_indices = @transform_3, window_bounds = array<i64: 128, 1>}, {transform_indices = @transform_4, window_bounds = array<i64: 2>}, {transform_indices = @transform_5, window_bounds = array<i64: 1, 1, 8>}]} {
    %c0 = arith.constant 0 : index
    %c0_0 = arith.constant 0 : index
    %0 = vector.load %arg2[%c0, %c0_0] : memref<128x64xf32, #tpu.memory_space<vmem>>, vector<128x64xf32>
    %c0_1 = arith.constant 0 : index
    %c0_2 = arith.constant 0 : index
    %1 = vector.load %arg1[%c0_1, %c0_2] : memref<8x64xf32, #tpu.memory_space<vmem>>, vector<8x64xf32>
    %cst = arith.constant dense<0.000000e+00> : vector<128x8xf32>
    %2 = tpu.matmul %0, %1, %cst {dimension_numbers = #tpu.dot_dimension_numbers<[1], [1], [0], [0], [0, 0, 1, 0], [], []>} : vector<128x64xf32>, vector<8x64xf32>, vector<128x8xf32> -> vector<128x8xf32>
    %c0_3 = arith.constant 0 : index
    %c0_4 = arith.constant 0 : index
    %3 = vector.load %arg3[%c0_3, %c0_4] : memref<128x1xf32, #tpu.memory_space<vmem>>, vector<128x1xf32>
    %4 = vector.broadcast %3 : vector<128x1xf32> to vector<128x8xf32>
    %5 = arith.addf %2, %4 : vector<128x8xf32>
    %cst_5 = arith.constant 0.000000e+00 : f32
    %6 = vector.broadcast %cst_5 : f32 to vector<128x8xf32>
    %7 = arith.maximumf %5, %6 : vector<128x8xf32>
    %8 = vector.extract_strided_slice %7 {offsets = [0, 0], sizes = [1, 8], strides = [1, 1]} : vector<128x8xf32> to vector<1x8xf32>
    %9 = vector.extract_strided_slice %7 {offsets = [1, 0], sizes = [1, 8], strides = [1, 1]} : vector<128x8xf32> to vector<1x8xf32>
    %c0_6 = arith.constant 0 : index
    %c0_7 = arith.constant 0 : index
    %10 = vector.load %arg4[%c0_6, %c0_7] : memref<128x1xf32, #tpu.memory_space<vmem>>, vector<128x1xf32>
    %11 = vector.broadcast %10 : vector<128x1xf32> to vector<128x8xf32>
    %12 = arith.mulf %7, %11 : vector<128x8xf32>
    %cst_8 = arith.constant dense<0.000000e+00> : vector<8xf32>
    %13 = vector.multi_reduction <add>, %12, %cst_8 [0] : vector<128x8xf32> to vector<8xf32>
    %14 = vector.shape_cast %13 : vector<8xf32> to vector<1x8xf32>
    %c0_9 = arith.constant 0 : index
    %15 = memref.load %arg5[%c0_9] : memref<2xf32, #tpu.memory_space<smem>>
    %16 = vector.broadcast %15 : f32 to vector<1x8xf32>
    %17 = arith.addf %14, %16 : vector<1x8xf32>
    %cst_10 = arith.constant 0.000000e+00 : f32
    %18 = vector.broadcast %cst_10 : f32 to vector<1x8xf32>
    %19 = arith.subf %18, %17 : vector<1x8xf32>
    %20 = math.exp %19 : vector<1x8xf32>
    %cst_11 = arith.constant 1.000000e+00 : f32
    %21 = vector.broadcast %cst_11 : f32 to vector<1x8xf32>
    %22 = arith.addf %21, %20 : vector<1x8xf32>
    %cst_12 = arith.constant 1.000000e+00 : f32
    %23 = vector.broadcast %cst_12 : f32 to vector<1x8xf32>
    %24 = arith.divf %23, %22 : vector<1x8xf32>
    %25 = arith.mulf %24, %8 : vector<1x8xf32>
    %cst_13 = arith.constant 1.000000e+00 : f32
    %26 = vector.broadcast %cst_13 : f32 to vector<1x8xf32>
    %27 = arith.subf %26, %24 : vector<1x8xf32>
    %28 = arith.mulf %27, %9 : vector<1x8xf32>
    %29 = arith.addf %25, %28 : vector<1x8xf32>
    %c1 = arith.constant 1 : index
    %30 = memref.load %arg5[%c1] : memref<2xf32, #tpu.memory_space<smem>>
    %31 = vector.broadcast %30 : f32 to vector<1x8xf32>
    %32 = arith.addf %29, %31 : vector<1x8xf32>
    %c0_14 = arith.constant 0 : index
    %c0_15 = arith.constant 0 : index
    %c0_16 = arith.constant 0 : index
    %33 = vector.load %arg6[%c0_14, %c0_15, %c0_16] : memref<1x1x8xf32, #tpu.memory_space<vmem>>, vector<1x1x8xf32>
    %34 = vector.shape_cast %33 : vector<1x1x8xf32> to vector<1x8xf32>
    %35 = vector.shape_cast %32 : vector<1x8xf32> to vector<1x1x8xf32>
    tpu.vector_store %arg6[%c0_14, %c0_15, %c0_16], %35 {strides = array<i32>} : memref<1x1x8xf32, #tpu.memory_space<vmem>>, vector<1x1x8xf32>,
    return
  }
  func.func @transform_0(%arg0: i32) -> (i32, i32) {
    %c0_i32 = arith.constant 0 : i32
    %c0_i32_0 = arith.constant 0 : i32
    return %arg0, %c0_i32 : i32, i32
  }
  func.func @transform_1(%arg0: i32) -> (i32, i32) {
    %c0_i32 = arith.constant 0 : i32
    %c0_i32_0 = arith.constant 0 : i32
    %c0_i32_1 = arith.constant 0 : i32
    return %c0_i32, %c0_i32_0 : i32, i32
  }
  func.func @transform_2(%arg0: i32) -> (i32, i32) {
    %c0_i32 = arith.constant 0 : i32
    %c0_i32_0 = arith.constant 0 : i32
    %c0_i32_1 = arith.constant 0 : i32
    return %c0_i32, %c0_i32_0 : i32, i32
  }
  func.func @transform_3(%arg0: i32) -> (i32, i32) {
    %c0_i32 = arith.constant 0 : i32
    %c0_i32_0 = arith.constant 0 : i32
    %c0_i32_1 = arith.constant 0 : i32
    return %c0_i32, %c0_i32_0 : i32, i32
  }
  func.func @transform_4(%arg0: i32) -> i32 {
    %c0_i32 = arith.constant 0 : i32
    %c0_i32_0 = arith.constant 0 : i32
    return %c0_i32 : i32
  }
  func.func @transform_5(%arg0: i32) -> (i32, i32, i32) {
    %c0_i32 = arith.constant 0 : i32
    %c0_i32_0 = arith.constant 0 : i32
    %c0_i32_1 = arith.constant 0 : i32
    return %arg0, %c0_i32, %c0_i32_0 : i32, i32, i32
  }
}

</mosaic_0001>

<llo_original>
// kernel: tpu_custom_call.1
$region0: #{tpu_custom_call.1}
  #allocation0 [shape = 'u32[]', space=smem, size = 0x4, offset = 0x4, fixed_abs, tag = 'smem constant byte address 0x4 - core index']
  #allocation1 [shape = 'u32[144,128]{1,0:T(1,128)}', space=vmem, size = 0x12000, scoped, tag = 'internal scratch']
  %s0 = inlined_call_operand.vmem [shape: f32[8,64], index: 0, kind: input, shape index: {}]
  %s1 = inlined_call_operand.vmem [shape: f32[128,64], index: 1, kind: input, shape index: {}]
  %s2 = inlined_call_operand.vmem [shape: f32[128,1], index: 2, kind: input, shape index: {}]
  %s3 = inlined_call_operand.vmem [shape: f32[128,1], index: 3, kind: input, shape index: {}]
  %s4 = inlined_call_operand.vmem [shape: f32[2], index: 4, kind: input, shape index: {}]
  %s5 = inlined_call_operand.hbm [shape: f32[1,1,8], index: 5, kind: output, shape index: {}]
  %s6 = sld [smem:[#allocation0]]
  $region34: #{tpu_custom_call.1} parent=0
    _
  %s8 = ssub.s32 1, %s6
  %s9 = scalar_select 0, %s8, %s6
  $region1: #{tpu_custom_call.1} parent=0
    #allocation2 [shape = 'u8[512]{0}', space=smem, size = 0x200, scoped, tag = 'input window, operand 4, single buffered']
    #allocation3 [shape = 's32[1]{0}', space=sflag, size = 0x4, scoped, tag = 'scoped memory for tpu_custom_call.1']
    #allocation4 [shape = 's32[1]{0}', space=sflag, size = 0x4, scoped, tag = 'scoped memory for tpu_custom_call.1']
    #allocation5 [shape = 'u8[512]{0}', space=vmem, size = 0x400, scoped, tag = 'output window, operand 0, single buffered']
    %10 = vsyncpa [#allocation4], 0
    %11 = vsyncpa [#allocation3], 0
    // Predicated region
    $region2: #{tpu_custom_call.1} parent=1 // pred_check
      _
    $region3: #{tpu_custom_call.1} parent=1 // pred_check_branch
      %13 = sbr.rel (0) target = $region5
    $region4: #{tpu_custom_call.1} parent=1 // pred_region
      _
    $region5: #{tpu_custom_call.1} parent=1 // pred_fallthru
      _
    // Predicated region
    $region6: #{tpu_custom_call.1} parent=1 // pred_check
      _
    $region7: #{tpu_custom_call.1} parent=1 // pred_check_branch
      %15 = sbr.rel (0) target = $region9
    $region8: #{tpu_custom_call.1} parent=1 // pred_region
      _
    $region9: #{tpu_custom_call.1} parent=1 // pred_fallthru
      _
    // Predicated region
    $region10: #{tpu_custom_call.1} parent=1 // pred_check
      _
    $region11: #{tpu_custom_call.1} parent=1 // pred_check_branch
      %17 = sbr.rel (0) target = $region13
    $region12: #{tpu_custom_call.1} parent=1 // pred_region
      _
    $region13: #{tpu_custom_call.1} parent=1 // pred_fallthru
      _
    // Predicated region
    $region14: #{tpu_custom_call.1} parent=1 // pred_check
      _
    $region15: #{tpu_custom_call.1} parent=1 // pred_check_branch
      %19 = sbr.rel (0) target = $region17
    $region16: #{tpu_custom_call.1} parent=1 // pred_region
      _
    $region17: #{tpu_custom_call.1} parent=1 // pred_fallthru
      _
    // Predicated region
    $region18: #{tpu_custom_call.1} parent=1 // pred_check
      _
    $region19: #{tpu_custom_call.1} parent=1 // pred_check_branch
      %21 = sbr.rel (0) target = $region21
    $region20: #{tpu_custom_call.1} parent=1 // pred_region
      %s23 = ssub.s32 16, 16
      %24 = vsyncadd [#allocation4], %s23
      %s26 = sshll.u32 %s4, 4
      %s27 = int_to_ptr.vmem [resolvable:$true] %s26
      %29 = dma.vmem_to_smem %s27, 16, [#allocation2], [#allocation4]
    $region21: #{tpu_custom_call.1} parent=1 // pred_fallthru
      _
    // Predicated region
    $region22: #{tpu_custom_call.1} parent=1 // pred_check
      _
    $region23: #{tpu_custom_call.1} parent=1 // pred_check_branch
      %31 = sbr.rel (0) target = $region25
    $region24: #{tpu_custom_call.1} parent=1 // pred_region
      %32 = dma.done [#allocation4], 16
    $region25: #{tpu_custom_call.1} parent=1 // pred_fallthru
      _
    %33 = sfence
    %v34 = vld [vmem:[%s1] sm:$0xff]
    %v35 = vld [vmem:[%s1 + $0x8] sm:$0xff]
    %v36 = vld [vmem:[%s1 + $0x10] sm:$0xff]
    %v37 = vld [vmem:[%s1 + $0x18] sm:$0xff]
    %v38 = vld [vmem:[%s1 + $0x20] sm:$0xff]
    %v39 = vld [vmem:[%s1 + $0x28] sm:$0xff]
    %v40 = vld [vmem:[%s1 + $0x30] sm:$0xff]
    %v41 = vld [vmem:[%s1 + $0x38] sm:$0xff]
    %v42 = vld [vmem:[%s1 + $0x40] sm:$0xff]
    %v43 = vld [vmem:[%s1 + $0x48] sm:$0xff]
    %v44 = vld [vmem:[%s1 + $0x50] sm:$0xff]
    %v45 = vld [vmem:[%s1 + $0x58] sm:$0xff]
    %v46 = vld [vmem:[%s1 + $0x60] sm:$0xff]
    %v47 = vld [vmem:[%s1 + $0x68] sm:$0xff]
    %v48 = vld [vmem:[%s1 + $0x70] sm:$0xff]
    %v49 = vld [vmem:[%s1 + $0x78] sm:$0xff]
    %v50 = vld [vmem:[%s0] sm:$0xff]
    %v51 = vld [vmem:[%s2] sm:$0xff]
    %v52 = vld [vmem:[%s2 + $0x8] sm:$0xff]
    %v53 = vld [vmem:[%s2 + $0x10] sm:$0xff]
    %v54 = vld [vmem:[%s2 + $0x18] sm:$0xff]
    %v55 = vld [vmem:[%s2 + $0x20] sm:$0xff]
    %v56 = vld [vmem:[%s2 + $0x28] sm:$0xff]
    %v57 = vld [vmem:[%s2 + $0x30] sm:$0xff]
    %v58 = vld [vmem:[%s2 + $0x38] sm:$0xff]
    %v59 = vld [vmem:[%s2 + $0x40] sm:$0xff]
    %v60 = vld [vmem:[%s2 + $0x48] sm:$0xff]
    %v61 = vld [vmem:[%s2 + $0x50] sm:$0xff]
    %v62 = vld [vmem:[%s2 + $0x58] sm:$0xff]
    %v63 = vld [vmem:[%s2 + $0x60] sm:$0xff]
    %v64 = vld [vmem:[%s2 + $0x68] sm:$0xff]
    %v65 = vld [vmem:[%s2 + $0x70] sm:$0xff]
    %v66 = vld [vmem:[%s2 + $0x78] sm:$0xff]
    %68 = vset.pattern.permute.xlu0 0
    %69 = vperm.xlu0 %68, %v51
    %v70 = vpop.permute.xlu0 %69
    %73 = vset.pattern.permute.xlu0 0
    %74 = vperm.xlu0 %73, %v52
    %v75 = vpop.permute.xlu0 %74
    %78 = vset.pattern.permute.xlu0 0
    %79 = vperm.xlu0 %78, %v53
    %v80 = vpop.permute.xlu0 %79
    %83 = vset.pattern.permute.xlu0 0
    %84 = vperm.xlu0 %83, %v54
    %v85 = vpop.permute.xlu0 %84
    %88 = vset.pattern.permute.xlu0 0
    %89 = vperm.xlu0 %88, %v55
    %v90 = vpop.permute.xlu0 %89
    %93 = vset.pattern.permute.xlu0 0
    %94 = vperm.xlu0 %93, %v56
    %v95 = vpop.permute.xlu0 %94
    %98 = vset.pattern.permute.xlu0 0
    %99 = vperm.xlu0 %98, %v57
    %v100 = vpop.permute.xlu0 %99
    %103 = vset.pattern.permute.xlu0 0
    %104 = vperm.xlu0 %103, %v58
    %v105 = vpop.permute.xlu0 %104
    %108 = vset.pattern.permute.xlu0 0
    %109 = vperm.xlu0 %108, %v59
    %v110 = vpop.permute.xlu0 %109
    %113 = vset.pattern.permute.xlu0 0
    %114 = vperm.xlu0 %113, %v60
    %v115 = vpop.permute.xlu0 %114
    %118 = vset.pattern.permute.xlu0 0
    %119 = vperm.xlu0 %118, %v61
    %v120 = vpop.permute.xlu0 %119
    %123 = vset.pattern.permute.xlu0 0
    %124 = vperm.xlu0 %123, %v62
    %v125 = vpop.permute.xlu0 %124
    %128 = vset.pattern.permute.xlu0 0
    %129 = vperm.xlu0 %128, %v63
    %v130 = vpop.permute.xlu0 %129
    %133 = vset.pattern.permute.xlu0 0
    %134 = vperm.xlu0 %133, %v64
    %v135 = vpop.permute.xlu0 %134
    %138 = vset.pattern.permute.xlu0 0
    %139 = vperm.xlu0 %138, %v65
    %v140 = vpop.permute.xlu0 %139
    %143 = vset.pattern.permute.xlu0 0
    %144 = vperm.xlu0 %143, %v66
    %v145 = vpop.permute.xlu0 %144
    %vm147 = vcmask 523264
    %v149 = vsel %vm147, %v34, 0
    %v152 = vsel %vm147, %v35, 0
    %v155 = vsel %vm147, %v36, 0
    %v158 = vsel %vm147, %v37, 0
    %v161 = vsel %vm147, %v38, 0
    %v164 = vsel %vm147, %v39, 0
    %v167 = vsel %vm147, %v40, 0
    %v170 = vsel %vm147, %v41, 0
    %v173 = vsel %vm147, %v42, 0
    %v176 = vsel %vm147, %v43, 0
    %v179 = vsel %vm147, %v44, 0
    %v182 = vsel %vm147, %v45, 0
    %v185 = vsel %vm147, %v46, 0
    %v188 = vsel %vm147, %v47, 0
    %v191 = vsel %vm147, %v48, 0
    %v194 = vsel %vm147, %v49, 0
    %v197 = vsel %vm147, %v50, 0
    %199 = vmatprep.subr.mxu0 0.0
    %200 = vmatpush1.xpose.msra.mxu0 0.0
    %201 = vmatprep.subr.mxu0 0.0
    %202 = vmatpush1.xpose.msra.mxu0 0.0
    %203 = vmatprep.subr.mxu0 0.0
    %204 = vmatpush1.xpose.msra.mxu0 0.0
    %205 = vmatprep.subr.mxu0 0.0
    %206 = vmatpush1.xpose.msra.mxu0 0.0
    %207 = vmatprep.subr.mxu0 0.0
    %208 = vmatpush1.xpose.msra.mxu0 0.0
    %209 = vmatprep.subr.mxu0 0.0
    %210 = vmatpush1.xpose.msra.mxu0 0.0
    %211 = vmatprep.subr.mxu0 0.0
    %212 = vmatpush1.xpose.msra.mxu0 0.0
    %213 = vmatprep.subr.mxu0 0.0
    %214 = vmatpush1.xpose.msra.mxu0 0.0
    %215 = vmatprep.subr.mxu0 0.0
    %216 = vmatpush1.xpose.msra.mxu0 0.0
    %217 = vmatprep.subr.mxu0 0.0
    %218 = vmatpush1.xpose.msra.mxu0 0.0
    %219 = vmatprep.subr.mxu0 0.0
    %220 = vmatpush1.xpose.msra.mxu0 0.0
    %221 = vmatprep.subr.mxu0 0.0
    %222 = vmatpush1.xpose.msra.mxu0 0.0
    %223 = vmatprep.subr.mxu0 0.0
    %224 = vmatpush1.xpose.msra.mxu0 0.0
    %225 = vmatprep.subr.mxu0 0.0
    %226 = vmatpush1.xpose.msra.mxu0 0.0
    %227 = vmatprep.subr.mxu0 0.0
    %228 = vmatpush1.xpose.msra.mxu0 0.0
    %229 = vmatprep.subr.mxu0 0.0
    %230 = vmatpush1.xpose.msra.mxu0 %v197
    %231 = vmatprep.subr.mxu0 0.0
    %232 = vmatpush2.xpose.msra.mxu0 0.0
    %233 = vmatprep.subr.mxu0 0.0
    %234 = vmatpush2.xpose.msra.mxu0 0.0
    %235 = vmatprep.subr.mxu0 0.0
    %236 = vmatpush2.xpose.msra.mxu0 0.0
    %237 = vmatprep.subr.mxu0 0.0
    %238 = vmatpush2.xpose.msra.mxu0 0.0
    %239 = vmatprep.subr.mxu0 0.0
    %240 = vmatpush2.xpose.msra.mxu0 0.0
    %241 = vmatprep.subr.mxu0 0.0
    %242 = vmatpush2.xpose.msra.mxu0 0.0
    %243 = vmatprep.subr.mxu0 0.0
    %244 = vmatpush2.xpose.msra.mxu0 0.0
    %245 = vmatprep.subr.mxu0 0.0
    %246 = vmatpush2.xpose.msra.mxu0 0.0
    %247 = vmatprep.subr.mxu0 0.0
    %248 = vmatpush2.xpose.msra.mxu0 0.0
    %249 = vmatprep.subr.mxu0 0.0
    %250 = vmatpush2.xpose.msra.mxu0 0.0
    %251 = vmatprep.subr.mxu0 0.0
    %252 = vmatpush2.xpose.msra.mxu0 0.0
    %253 = vmatprep.subr.mxu0 0.0
    %254 = vmatpush2.xpose.msra.mxu0 0.0
    %255 = vmatprep.subr.mxu0 0.0
    %256 = vmatpush2.xpose.msra.mxu0 0.0
    %257 = vmatprep.subr.mxu0 0.0
    %258 = vmatpush2.xpose.msra.mxu0 0.0
    %259 = vmatprep.subr.mxu0 0.0
    %260 = vmatpush2.xpose.msra.mxu0 0.0
    %261 = vmatprep.subr.mxu0 0.0
    %262 = vmatpush2.xpose.msra.mxu0 0.0
    %263 = vmatprep.mubr.f32.mxu0 0.0
    %264 = vmatmul.mubr.f32.gmra.mxu0 %v149
    %v265 = vpop.f32.mrf.mxu0
    %v266 = vadd.f32 %v70, %v265
    %v267 = vpop.f32.mrf.mxu0
    %268 = vmatprep.mubr.f32.mxu0 0.0
    %269 = vmatmul.mubr.f32.gmra.mxu0 %v152
    %v270 = vpop.f32.mrf.mxu0
    %v271 = vadd.f32 %v75, %v270
    %v272 = vpop.f32.mrf.mxu0
    %273 = vmatprep.mubr.f32.mxu0 0.0
    %274 = vmatmul.mubr.f32.gmra.mxu0 %v155
    %v275 = vpop.f32.mrf.mxu0
    %v276 = vadd.f32 %v80, %v275
    %v277 = vpop.f32.mrf.mxu0
    %278 = vmatprep.mubr.f32.mxu0 0.0
    %279 = vmatmul.mubr.f32.gmra.mxu0 %v158
    %v280 = vpop.f32.mrf.mxu0
    %v281 = vadd.f32 %v85, %v280
    %v282 = vpop.f32.mrf.mxu0
    %283 = vmatprep.mubr.f32.mxu0 0.0
    %284 = vmatmul.mubr.f32.gmra.mxu0 %v161
    %v285 = vpop.f32.mrf.mxu0
    %v286 = vadd.f32 %v90, %v285
    %v287 = vpop.f32.mrf.mxu0
    %288 = vmatprep.mubr.f32.mxu0 0.0
    %289 = vmatmul.mubr.f32.gmra.mxu0 %v164
    %v290 = vpop.f32.mrf.mxu0
    %v291 = vadd.f32 %v95, %v290
    %v292 = vpop.f32.mrf.mxu0
    %293 = vmatprep.mubr.f32.mxu0 0.0
    %294 = vmatmul.mubr.f32.gmra.mxu0 %v167
    %v295 = vpop.f32.mrf.mxu0
    %v296 = vadd.f32 %v100, %v295
    %v297 = vpop.f32.mrf.mxu0
    %298 = vmatprep.mubr.f32.mxu0 0.0
    %299 = vmatmul.mubr.f32.gmra.mxu0 %v170
    %v300 = vpop.f32.mrf.mxu0
    %v301 = vadd.f32 %v105, %v300
    %v302 = vpop.f32.mrf.mxu0
    %303 = vmatprep.mubr.f32.mxu0 0.0
    %304 = vmatmul.mubr.f32.gmra.mxu0 %v173
    %v305 = vpop.f32.mrf.mxu0
    %v306 = vadd.f32 %v110, %v305
    %v307 = vpop.f32.mrf.mxu0
    %308 = vmatprep.mubr.f32.mxu0 0.0
    %309 = vmatmul.mubr.f32.gmra.mxu0 %v176
    %v310 = vpop.f32.mrf.mxu0
    %v311 = vadd.f32 %v115, %v310
    %v312 = vpop.f32.mrf.mxu0
    %313 = vmatprep.mubr.f32.mxu0 0.0
    %314 = vmatmul.mubr.f32.gmra.mxu0 %v179
    %v315 = vpop.f32.mrf.mxu0
    %v316 = vadd.f32 %v120, %v315
    %v317 = vpop.f32.mrf.mxu0
    %318 = vmatprep.mubr.f32.mxu0 0.0
    %319 = vmatmul.mubr.f32.gmra.mxu0 %v182
    %v320 = vpop.f32.mrf.mxu0
    %v321 = vadd.f32 %v125, %v320
    %v322 = vpop.f32.mrf.mxu0
    %323 = vmatprep.mubr.f32.mxu0 0.0
    %324 = vmatmul.mubr.f32.gmra.mxu0 %v185
    %v325 = vpop.f32.mrf.mxu0
    %v326 = vadd.f32 %v130, %v325
    %v327 = vpop.f32.mrf.mxu0
    %328 = vmatprep.mubr.f32.mxu0 0.0
    %329 = vmatmul.mubr.f32.gmra.mxu0 %v188
    %v330 = vpop.f32.mrf.mxu0
    %v331 = vadd.f32 %v135, %v330
    %v332 = vpop.f32.mrf.mxu0
    %333 = vmatprep.mubr.f32.mxu0 0.0
    %334 = vmatmul.mubr.f32.gmra.mxu0 %v191
    %v335 = vpop.f32.mrf.mxu0
    %v336 = vadd.f32 %v140, %v335
    %v337 = vpop.f32.mrf.mxu0
    %338 = vmatprep.mubr.f32.mxu0 0.0
    %339 = vmatmul.mubr.f32.gmra.mxu0 %v194
    %v340 = vpop.f32.mrf.mxu0
    %v341 = vadd.f32 %v145, %v340
    %v342 = vpop.f32.mrf.mxu0
    %343 = vdwg.mxu0
    %v344 = vmax.f32 %v266, 0.0
    %v345 = vmax.f32 %v271, 0.0
    %v346 = vmax.f32 %v276, 0.0
    %v347 = vmax.f32 %v281, 0.0
    %v348 = vmax.f32 %v286, 0.0
    %v349 = vmax.f32 %v291, 0.0
    %v350 = vmax.f32 %v296, 0.0
    %v351 = vmax.f32 %v301, 0.0
    %v352 = vmax.f32 %v306, 0.0
    %v353 = vmax.f32 %v311, 0.0
    %v354 = vmax.f32 %v316, 0.0
    %v355 = vmax.f32 %v321, 0.0
    %v356 = vmax.f32 %v326, 0.0
    %v357 = vmax.f32 %v331, 0.0
    %v358 = vmax.f32 %v336, 0.0
    %v359 = vmax.f32 %v341, 0.0
    %v360 = vld [vmem:[%s3] sm:$0xff]
    %v361 = vld [vmem:[%s3 + $0x8] sm:$0xff]
    %v362 = vld [vmem:[%s3 + $0x10] sm:$0xff]
    %v363 = vld [vmem:[%s3 + $0x18] sm:$0xff]
    %v364 = vld [vmem:[%s3 + $0x20] sm:$0xff]
    %v365 = vld [vmem:[%s3 + $0x28] sm:$0xff]
    %v366 = vld [vmem:[%s3 + $0x30] sm:$0xff]
    %v367 = vld [vmem:[%s3 + $0x38] sm:$0xff]
    %v368 = vld [vmem:[%s3 + $0x40] sm:$0xff]
    %v369 = vld [vmem:[%s3 + $0x48] sm:$0xff]
    %v370 = vld [vmem:[%s3 + $0x50] sm:$0xff]
    %v371 = vld [vmem:[%s3 + $0x58] sm:$0xff]
    %v372 = vld [vmem:[%s3 + $0x60] sm:$0xff]
    %v373 = vld [vmem:[%s3 + $0x68] sm:$0xff]
    %v374 = vld [vmem:[%s3 + $0x70] sm:$0xff]
    %v375 = vld [vmem:[%s3 + $0x78] sm:$0xff]
    %377 = vset.pattern.permute.xlu0 0
    %378 = vperm.xlu0 %377, %v360
    %v379 = vpop.permute.xlu0 %378
    %382 = vset.pattern.permute.xlu0 0
    %383 = vperm.xlu0 %382, %v361
    %v384 = vpop.permute.xlu0 %383
    %387 = vset.pattern.permute.xlu0 0
    %388 = vperm.xlu0 %387, %v362
    %v389 = vpop.permute.xlu0 %388
    %392 = vset.pattern.permute.xlu0 0
    %393 = vperm.xlu0 %392, %v363
    %v394 = vpop.permute.xlu0 %393
    %397 = vset.pattern.permute.xlu0 0
    %398 = vperm.xlu0 %397, %v364
    %v399 = vpop.permute.xlu0 %398
    %402 = vset.pattern.permute.xlu0 0
    %403 = vperm.xlu0 %402, %v365
    %v404 = vpop.permute.xlu0 %403
    %407 = vset.pattern.permute.xlu0 0
    %408 = vperm.xlu0 %407, %v366
    %v409 = vpop.permute.xlu0 %408
    %412 = vset.pattern.permute.xlu0 0
    %413 = vperm.xlu0 %412, %v367
    %v414 = vpop.permute.xlu0 %413
    %417 = vset.pattern.permute.xlu0 0
    %418 = vperm.xlu0 %417, %v368
    %v419 = vpop.permute.xlu0 %418
    %422 = vset.pattern.permute.xlu0 0
    %423 = vperm.xlu0 %422, %v369
    %v424 = vpop.permute.xlu0 %423
    %427 = vset.pattern.permute.xlu0 0
    %428 = vperm.xlu0 %427, %v370
    %v429 = vpop.permute.xlu0 %428
    %432 = vset.pattern.permute.xlu0 0
    %433 = vperm.xlu0 %432, %v371
    %v434 = vpop.permute.xlu0 %433
    %437 = vset.pattern.permute.xlu0 0
    %438 = vperm.xlu0 %437, %v372
    %v439 = vpop.permute.xlu0 %438
    %442 = vset.pattern.permute.xlu0 0
    %443 = vperm.xlu0 %442, %v373
    %v444 = vpop.permute.xlu0 %443
    %447 = vset.pattern.permute.xlu0 0
    %448 = vperm.xlu0 %447, %v374
    %v449 = vpop.permute.xlu0 %448
    %452 = vset.pattern.permute.xlu0 0
    %453 = vperm.xlu0 %452, %v375
    %v454 = vpop.permute.xlu0 %453
    %v456 = vmul.f32 %v344, %v379
    %v457 = vmul.f32 %v345, %v384
    %v458 = vmul.f32 %v346, %v389
    %v459 = vmul.f32 %v347, %v394
    %v460 = vmul.f32 %v348, %v399
    %v461 = vmul.f32 %v349, %v404
    %v462 = vmul.f32 %v350, %v409
    %v463 = vmul.f32 %v351, %v414
    %v464 = vmul.f32 %v352, %v419
    %v465 = vmul.f32 %v353, %v424
    %v466 = vmul.f32 %v354, %v429
    %v467 = vmul.f32 %v355, %v434
    %v468 = vmul.f32 %v356, %v439
    %v469 = vmul.f32 %v357, %v444
    %v470 = vmul.f32 %v358, %v449
    %v471 = vmul.f32 %v359, %v454
    %vm472 = vcmask 64512
    %v473 = vsel %vm472, %v456, 0.0
    %v474 = vsel %vm472, %v457, 0.0
    %v475 = vadd.f32 %v473, %v474
    %v476 = vsel %vm472, %v458, 0.0
    %v477 = vadd.f32 %v475, %v476
    %v478 = vsel %vm472, %v459, 0.0
    %v479 = vadd.f32 %v477, %v478
    %v480 = vsel %vm472, %v460, 0.0
    %v481 = vadd.f32 %v479, %v480
    %v482 = vsel %vm472, %v461, 0.0
    %v483 = vadd.f32 %v481, %v482
    %v484 = vsel %vm472, %v462, 0.0
    %v485 = vadd.f32 %v483, %v484
    %v486 = vsel %vm472, %v463, 0.0
    %v487 = vadd.f32 %v485, %v486
    %v488 = vsel %vm472, %v464, 0.0
    %v489 = vadd.f32 %v487, %v488
    %v490 = vsel %vm472, %v465, 0.0
    %v491 = vadd.f32 %v489, %v490
    %v492 = vsel %vm472, %v466, 0.0
    %v493 = vadd.f32 %v491, %v492
    %v494 = vsel %vm472, %v467, 0.0
    %v495 = vadd.f32 %v493, %v494
    %v496 = vsel %vm472, %v468, 0.0
    %v497 = vadd.f32 %v495, %v496
    %v498 = vsel %vm472, %v469, 0.0
    %v499 = vadd.f32 %v497, %v498
    %v500 = vsel %vm472, %v470, 0.0
    %v501 = vadd.f32 %v499, %v500
    %v502 = vsel %vm472, %v471, 0.0
    %v503 = vadd.f32 %v501, %v502
    %v504 = vrot.slane %v503, 4
    %v505 = vadd.f32 %v503, %v504
    %v506 = vrot.slane %v505, 2
    %v507 = vadd.f32 %v505, %v506
    %v508 = vrot.slane %v507, 1
    %v509 = vadd.f32 %v507, %v508
    %s510 = sld [smem:[#allocation2]]
    %v511 = vstv %s510
    %v512 = vadd.f32 %v509, %v511
    %v513 = vsub.f32 0.0, %v512
    %v514 = vmul.f32 %v513, 1.442695
    %v515 = vpow.pop %v514
    %v516 = vadd.f32 %v515, 1.0
    %v517 = vrcp.pop %v516
    %v518 = vmul.f32 1.0, %v517
    %v519 = vmul.f32 %v518, %v344
    %v520 = vsub.f32 1.0, %v518
    %v521 = vmul.f32 %v520, %v344
    %v523 = vrot.slane %v521, 1
    %v525 = vadd.f32 %v519, %v523
    %s526 = sld [smem:[#allocation2 + $0x1]]
    %v527 = vstv %s526
    %v528 = vadd.f32 %v525, %v527
    %vm529 = vcmask 57344
    %530 = vst.msk [vmem:[#allocation5] sm:$0x1] %vm529, %v528
    // Predicated region
    $region26: #{tpu_custom_call.1} parent=1 // pred_check
      _
    $region27: #{tpu_custom_call.1} parent=1 // pred_check_branch
      %532 = sbr.rel (0) target = $region29
    $region28: #{tpu_custom_call.1} parent=1 // pred_region
      %s534 = ssub.s32 16, 16
      %535 = vsyncadd [#allocation3], %s534
      %s537 = sshll.u32 [#allocation5], 4
      %s538 = int_to_ptr.vmem [resolvable:$true] %s537
      %540 = dma.vmem_to_hbm [thread:$0]  %s538, 16, %s5, [#allocation3]
    $region29: #{tpu_custom_call.1} parent=1 // pred_fallthru
      _
    // Predicated region
    $region30: #{tpu_custom_call.1} parent=1 // pred_check
      _
    $region31: #{tpu_custom_call.1} parent=1 // pred_check_branch
      %542 = sbr.rel (0) target = $region33
    $region32: #{tpu_custom_call.1} parent=1 // pred_region
      %543 = dma.done [#allocation3], 16
    $region33: #{tpu_custom_call.1} parent=1 // pred_fallthru
      _
    %544 = vsyncpa [#allocation3], 1
    %545 = vsyncpa [#allocation4], 1

</llo_original>
